<compile_context>
chip_gen: v6e
topology: v6e:2x2x1
jax: 0.10.0
libtpu: 0.0.40
codegen_flags: <defaults>
</compile_context>

<pallas_src>
import jax
import jax.numpy as jnp
from jax.experimental import pallas as pl
from jax.experimental.pallas import tpu as pltpu

_LANE = 128
_X_BLOCK_BYTES = 6 * 1024 * 1024     # per-step x block byte budget
_MIN_GRID_STEPS = 4                  # keep both v7x TensorCores fed
_VMEM_LIMIT = 32 * 1024 * 1024       # explicit scoped-VMEM limit (safe on v5e/v6e/v7x)


def _mosaic_kernel(x_ref, mask_ref, o_ref):
    # x_ref:    (C, TH, TW)  image channels for one (batch, row-tile)
    # mask_ref: (TH, TW)     integer channel index per pixel (caller's int dtype)
    # o_ref:    (TH, TW)     mosaiced output
    m = mask_ref[...]
    C = x_ref.shape[0]
    out = x_ref[C - 1]                       # per-channel ref reads, no full-block load
    for c in range(C - 2, -1, -1):           # select chain (out-of-range -> channel C-1)
        out = jnp.where(m == c, x_ref[c], out)
    o_ref[...] = out


def _pick_row_tile(n_rows: int, n_cols: int, n_chan: int, itemsize: int, batch: int) -> int:
    """Row-tile height: VMEM-budget-limited, >= _MIN_GRID_STEPS total steps if possible."""
    lane_cols = -(-n_cols // _LANE) * _LANE              # lane-padded width in VMEM
    bytes_per_row = max(1, n_chan * lane_cols * itemsize)
    tr = max(1, _X_BLOCK_BYTES // bytes_per_row)
    tiles_per_batch = -(-_MIN_GRID_STEPS // max(batch, 1))
    tr = min(tr, max(1, -(-n_rows // tiles_per_batch)))  # ensure enough grid steps
    if tr < n_rows:
        tr = max(8, (tr // 8) * 8)                       # multiple of 8 unless full-extent
    if tr >= n_rows:
        tr = n_rows                                      # full-extent tile (always legal)
    return tr


def mosaic(x: jax.Array, pattern: jax.Array) -> jax.Array:
    """Mosaic an RGB image to a Bayer pattern via per-pixel channel gather.

    Args:
        x:       (B, C, H, W) float image.
        pattern: (B, 1, H, W) integer channel indices in [0, C).

    Returns:
        (B, 1, H, W) mosaiced image, same dtype as x.
    """
    B, C, H, W = x.shape
    assert pattern.shape == (B, 1, H, W), "Invalid pattern/mask shape"
    assert jnp.issubdtype(pattern.dtype, jnp.integer), "pattern must be integer typed"

    HW = H * W
    if W % _LANE != 0 and HW % _LANE == 0:
        # Free reshape to lane-dense rows of exactly 128 lanes (unmasked full-lane stores).
        Hv, Wv = HW // _LANE, _LANE
    else:
        # Native layout: W is the lane dim (full-extent last block dim is always legal).
        Hv, Wv = H, W

    xk = x.reshape(B, C, Hv, Wv)         # bitcast-equivalent (contiguous) -> free
    mk = pattern.reshape(B, Hv, Wv)      # free; caller's integer dtype passed through

    itemsize = jnp.dtype(x.dtype).itemsize
    th = _pick_row_tile(Hv, Wv, C, itemsize, B)
    grid = (B, pl.cdiv(Hv, th))

    bytes_accessed = int(
        xk.size * itemsize
        + mk.size * jnp.dtype(pattern.dtype).itemsize
        + B * Hv * Wv * itemsize
    )

    out = pl.pallas_call(
        _mosaic_kernel,
        out_shape=jax.ShapeDtypeStruct((B, Hv, Wv), x.dtype),
        grid_spec=pl.GridSpec(
            grid=grid,
            in_specs=[
                pl.BlockSpec((None, C, th, Wv), lambda b, r: (b, 0, r, 0)),
                pl.BlockSpec((None, th, Wv), lambda b, r: (b, r, 0)),
            ],
            out_specs=pl.BlockSpec((None, th, Wv), lambda b, r: (b, r, 0)),
        ),
        compiler_params=pltpu.CompilerParams(
            dimension_semantics=("parallel", "parallel"),
            vmem_limit_bytes=_VMEM_LIMIT,
        ),
        cost_estimate=pl.CostEstimate(
            flops=0, transcendentals=0, bytes_accessed=bytes_accessed
        ),
    )(xk, mk)

    return out.reshape(B, 1, H, W)       # free reshape (same contiguous buffer)


if __name__ == "__main__":
    def run_case(key, B, C, H, W):
        k_img, k_mask = jax.random.split(key)
        x = jax.random.normal(k_img, (B, C, H, W), dtype=jnp.float32)
        pattern = jax.random.randint(k_mask, (B, 1, H, W), 0, C, dtype=jnp.int32)
        out = jax.block_until_ready(mosaic(x, pattern))
        ref = jnp.take_along_axis(x, pattern, axis=1)
        assert out.shape == (B, 1, H, W)
        assert jnp.array_equal(out, ref), f"Mismatch vs reference gather for {(B, C, H, W)}"

    keys = jax.random.split(jax.random.PRNGKey(0), 3)
    run_case(keys[0], 2, 3, 16, 16)   # lane-dense flattened path, single tile per batch
    run_case(keys[1], 1, 3, 20, 24)   # native path (H*W % 128 != 0), ragged last row-tile
    run_case(keys[2], 1, 3, 48, 32)   # flattened multi-tile path with ragged boundary

    print("KERNEL_OK")
</pallas_src>

<mosaic_0001>
module attributes {stable_mosaic.version = 11 : i64} {
  func.func @_mosaic_kernel(%arg0: i32, %arg1: i32, %arg2: memref<1x3x2x128xf32, #tpu.memory_space<vmem>>, %arg3: memref<1x2x128xi32, #tpu.memory_space<vmem>>, %arg4: memref<1x2x128xf32, #tpu.memory_space<vmem>>) attributes {dimension_semantics = [#tpu.dimension_semantics<parallel>, #tpu.dimension_semantics<parallel>], iteration_bounds = array<i64: 2, 1>, scalar_prefetch = 0 : i64, scratch_operands = 0 : i64, tpu.core_type = #tpu.core_type<tc>, window_params = [{transform_indices = @transform_0, window_bounds = array<i64: 1, 3, 2, 128>}, {transform_indices = @transform_1, window_bounds = array<i64: 1, 2, 128>}, {transform_indices = @transform_2, window_bounds = array<i64: 1, 2, 128>}]} {
    %c0 = arith.constant 0 : index
    %c0_0 = arith.constant 0 : index
    %c0_1 = arith.constant 0 : index
    %0 = vector.load %arg3[%c0, %c0_0, %c0_1] : memref<1x2x128xi32, #tpu.memory_space<vmem>>, vector<1x2x128xi32>
    %1 = vector.shape_cast %0 : vector<1x2x128xi32> to vector<2x128xi32>
    %c0_2 = arith.constant 0 : index
    %c2 = arith.constant 2 : index
    %c0_3 = arith.constant 0 : index
    %c0_4 = arith.constant 0 : index
    %2 = vector.load %arg2[%c0_2, %c2, %c0_3, %c0_4] : memref<1x3x2x128xf32, #tpu.memory_space<vmem>>, vector<1x1x2x128xf32>
    %3 = vector.shape_cast %2 : vector<1x1x2x128xf32> to vector<2x128xf32>
    %c1_i32 = arith.constant 1 : i32
    %4 = vector.broadcast %c1_i32 : i32 to vector<2x128xi32>
    %5 = arith.cmpi eq, %1, %4 : vector<2x128xi32>
    %c0_5 = arith.constant 0 : index
    %c1 = arith.constant 1 : index
    %c0_6 = arith.constant 0 : index
    %c0_7 = arith.constant 0 : index
    %6 = vector.load %arg2[%c0_5, %c1, %c0_6, %c0_7] : memref<1x3x2x128xf32, #tpu.memory_space<vmem>>, vector<1x1x2x128xf32>
    %7 = vector.shape_cast %6 : vector<1x1x2x128xf32> to vector<2x128xf32>
    %8 = arith.select %5, %7, %3 : vector<2x128xi1>, vector<2x128xf32>
    %c0_i32 = arith.constant 0 : i32
    %9 = vector.broadcast %c0_i32 : i32 to vector<2x128xi32>
    %10 = arith.cmpi eq, %1, %9 : vector<2x128xi32>
    %c0_8 = arith.constant 0 : index
    %c0_9 = arith.constant 0 : index
    %c0_10 = arith.constant 0 : index
    %c0_11 = arith.constant 0 : index
    %11 = vector.load %arg2[%c0_8, %c0_9, %c0_10, %c0_11] : memref<1x3x2x128xf32, #tpu.memory_space<vmem>>, vector<1x1x2x128xf32>
    %12 = vector.shape_cast %11 : vector<1x1x2x128xf32> to vector<2x128xf32>
    %13 = arith.select %10, %12, %8 : vector<2x128xi1>, vector<2x128xf32>
    %c0_12 = arith.constant 0 : index
    %c0_13 = arith.constant 0 : index
    %c0_14 = arith.constant 0 : index
    %14 = vector.load %arg4[%c0_12, %c0_13, %c0_14] : memref<1x2x128xf32, #tpu.memory_space<vmem>>, vector<1x2x128xf32>
    %15 = vector.shape_cast %14 : vector<1x2x128xf32> to vector<2x128xf32>
    %16 = vector.shape_cast %13 : vector<2x128xf32> to vector<1x2x128xf32>
    tpu.vector_store %arg4[%c0_12, %c0_13, %c0_14], %16 {strides = array<i32>} : memref<1x2x128xf32, #tpu.memory_space<vmem>>, vector<1x2x128xf32>,
    return
  }
  func.func @transform_0(%arg0: i32, %arg1: i32) -> (i32, i32, i32, i32) {
    %c0_i32 = arith.constant 0 : i32
    %c0_i32_0 = arith.constant 0 : i32
    %c0_i32_1 = arith.constant 0 : i32
    return %arg0, %c0_i32, %arg1, %c0_i32_0 : i32, i32, i32, i32
  }
  func.func @transform_1(%arg0: i32, %arg1: i32) -> (i32, i32, i32) {
    %c0_i32 = arith.constant 0 : i32
    %c0_i32_0 = arith.constant 0 : i32
    return %arg0, %arg1, %c0_i32 : i32, i32, i32
  }
  func.func @transform_2(%arg0: i32, %arg1: i32) -> (i32, i32, i32) {
    %c0_i32 = arith.constant 0 : i32
    %c0_i32_0 = arith.constant 0 : i32
    return %arg0, %arg1, %c0_i32 : i32, i32, i32
  }
}

</mosaic_0001>

<llo_original>
// kernel: tpu_custom_call.1
$region0: #{tpu_custom_call.1}
  #allocation0 [shape = 'u32[]', space=smem, size = 0x4, offset = 0x4, fixed_abs, tag = 'smem constant byte address 0x4 - core index']
  #allocation1 [shape = 'u32[144,128]{1,0:T(1,128)}', space=vmem, size = 0x12000, scoped, tag = 'internal scratch']
  %s0 = inlined_call_operand.hbm [shape: f32[2,3,2,128], index: 0, kind: input, shape index: {}]
  %s1 = inlined_call_operand.hbm [shape: s32[2,2,128], index: 1, kind: input, shape index: {}]
  %s2 = inlined_call_operand.hbm [shape: f32[2,2,128], index: 2, kind: output, shape index: {}]
  %s3 = sld [smem:[#allocation0]]
  $region49: #{tpu_custom_call.1} parent=0
    _
  %s5 = ssub.s32 1, %s3
  %s6 = scalar_select 0, %s5, %s3
  $region1: #{tpu_custom_call.1} parent=0
    #allocation2 [shape = 'u8[6144]{0}', space=vmem, size = 0x1800, scoped, tag = 'input window, operand 0']
    #allocation3 [shape = 's32[2]{0}', space=sflag, size = 0x8, scoped, tag = 'scoped memory for tpu_custom_call.1']
    #allocation4 [shape = 's32[2]{0}', space=sflag, size = 0x8, scoped, tag = 'scoped memory for tpu_custom_call.1']
    #allocation5 [shape = 'u8[2048]{0}', space=vmem, size = 0x800, scoped, tag = 'input window, operand 1']
    #allocation6 [shape = 's32[2]{0}', space=sflag, size = 0x8, scoped, tag = 'scoped memory for tpu_custom_call.1']
    #allocation7 [shape = 'u8[2048]{0}', space=vmem, size = 0x800, scoped, tag = 'output window, operand 0']
    %7 = vsyncpa [#allocation3], 0
    %s8 = scalar_lea.sflag [#allocation3], 1
    %9 = vsyncpa %s8, 0
    %10 = vsyncpa [#allocation6], 0
    %s11 = scalar_lea.sflag [#allocation6], 1
    %12 = vsyncpa %s11, 0
    %13 = vsyncpa [#allocation4], 0
    %s14 = scalar_lea.sflag [#allocation4], 1
    %15 = vsyncpa %s14, 0
    loop: start=0, step=1, limit=4
    $region2: #{tpu_custom_call.1} parent=1 // loop_pre_header
      _
    $region3: #{tpu_custom_call.1} parent=1 // loop_header
      %s17 = sphi 0, %s21
      %p18 = scmp.ge.s32.totalorder %s17, 4
      %s24 = sphi 0, %s36
      %s25 = sphi 0, %s32
      %s26 = sphi 0, %s24
      %s27 = sphi 0, %s25
      %s28 = sphi 0, %s26
      %s29 = sphi 0, %s27
      %s41 = sphi 0, %s43
      %s44 = sphi 0, %s41
      %s45 = sphi 0, %s44
      %s61 = sphi 0, %s45
      %s69 = sphi 0, %s71
      %s72 = sphi 0, %s69
      %s73 = sphi 0, %s72
      %s89 = sphi 0, %s73
      %s97 = sphi 0, %s99
      %s100 = sphi 0, %s97
      %s101 = sphi 0, %s100
      %s117 = sphi 0, %s101
    $region4: #{tpu_custom_call.1} parent=1 // loop_header_branch
      %20 = sbr.rel (%p18) target = $region8
    $region5: #{tpu_custom_call.1} parent=1 // loop_body
      %s22 = ssub.s32 %s17, 1
      %s23 = ssub.s32 %s17, 2
      %s30 = sadd.s32 1, %s25
      %p31 = scmp.ge.s32.totalorder %s30, 1
      %s32 = scalar_select %p31, 0, %s30
      %s33 = sadd.s32 1, %s24
      %s34 = scalar_select %p31, %s33, %s24
      %p35 = scmp.ge.s32.totalorder %s34, 2
      %s36 = scalar_select %p35, 0, %s34
      %s37 = ssub.s32 %s24, %s36
      %s38 = ssub.s32 %s25, %s32
      %s39 = sor.u32 %s37, %s38
      %p40 = scmp.eq.s32.totalorder %s39, 0
      %s42 = sadd.s32 %s41, 1
      %s43 = scalar_select %p40, %s41, %s42
      %p46 = pneg %p40
      %p47 = scmp.eq.s32.totalorder %s17, 1
      %p48 = por %p46, %p47
      %p49 = scmp.ne.s32.totalorder %s41, %s44
      %p50 = scmp.eq.s32.totalorder %s17, 0
      %p51 = por %p49, %p50
      %p52 = scmp.ne.s32.totalorder %s41, %s44
      %p53 = scmp.eq.s32.totalorder %s22, 1
      %p54 = por %p52, %p53
      %p55 = scmp.ne.s32.totalorder %s44, %s45
      %p56 = scmp.eq.s32.totalorder %s22, 0
      %p57 = por %p55, %p56
      %p58 = scmp.ne.s32.totalorder %s44, %s45
      %p59 = scmp.eq.s32.totalorder %s23, 1
      %p60 = por %p58, %p59
      %p62 = scmp.ne.s32.totalorder %s45, %s61
      %p63 = scmp.eq.s32.totalorder %s23, 0
      %p64 = por %p62, %p63
      %s65 = ssub.s32 %s24, %s36
      %s66 = ssub.s32 %s25, %s32
      %s67 = sor.u32 %s65, %s66
      %p68 = scmp.eq.s32.totalorder %s67, 0
      %s70 = sadd.s32 %s69, 1
      %s71 = scalar_select %p68, %s69, %s70
      %p74 = pneg %p68
      %p75 = scmp.eq.s32.totalorder %s17, 1
      %p76 = por %p74, %p75
      %p77 = scmp.ne.s32.totalorder %s69, %s72
      %p78 = scmp.eq.s32.totalorder %s17, 0
      %p79 = por %p77, %p78
      %p80 = scmp.ne.s32.totalorder %s69, %s72
      %p81 = scmp.eq.s32.totalorder %s22, 1
      %p82 = por %p80, %p81
      %p83 = scmp.ne.s32.totalorder %s72, %s73
      %p84 = scmp.eq.s32.totalorder %s22, 0
      %p85 = por %p83, %p84
      %p86 = scmp.ne.s32.totalorder %s72, %s73
      %p87 = scmp.eq.s32.totalorder %s23, 1
      %p88 = por %p86, %p87
      %p90 = scmp.ne.s32.totalorder %s73, %s89
      %p91 = scmp.eq.s32.totalorder %s23, 0
      %p92 = por %p90, %p91
      %s93 = ssub.s32 %s24, %s36
      %s94 = ssub.s32 %s25, %s32
      %s95 = sor.u32 %s93, %s94
      %p96 = scmp.eq.s32.totalorder %s95, 0
      %s98 = sadd.s32 %s97, 1
      %s99 = scalar_select %p96, %s97, %s98
      %p102 = pneg %p96
      %p103 = scmp.eq.s32.totalorder %s17, 1
      %p104 = por %p102, %p103
      %p105 = scmp.ne.s32.totalorder %s97, %s100
      %p106 = scmp.eq.s32.totalorder %s17, 0
      %p107 = por %p105, %p106
      %p108 = scmp.ne.s32.totalorder %s97, %s100
      %p109 = scmp.eq.s32.totalorder %s22, 1
      %p110 = por %p108, %p109
      %p111 = scmp.ne.s32.totalorder %s100, %s101
      %p112 = scmp.eq.s32.totalorder %s22, 0
      %p113 = por %p111, %p112
      %p114 = scmp.ne.s32.totalorder %s100, %s101
      %p115 = scmp.eq.s32.totalorder %s23, 1
      %p116 = por %p114, %p115
      %p118 = scmp.ne.s32.totalorder %s101, %s117
      %p119 = scmp.eq.s32.totalorder %s23, 0
      %p120 = por %p118, %p119
      %p121 = scmp.le.s32.totalorder 1, %s17
      %p122 = scmp.lt.s32.totalorder %s17, 3
      %p123 = pnand %p121, %p122
      %p124 = pneg %p123
      // Predicated region
      $region9: #{tpu_custom_call.1} parent=5 // pred_check
        _
      $region10: #{tpu_custom_call.1} parent=5 // pred_check_branch
        %126 = sbr.rel (%p123) target = $region12
      $region11: #{tpu_custom_call.1} parent=5 // pred_region
        %s127 = ssub.s32 %s17, 1
      $region12: #{tpu_custom_call.1} parent=5 // pred_fallthru
        _
      %p128 = scmp.lt.s32.totalorder %s17, 2
      // Predicated region
      $region13: #{tpu_custom_call.1} parent=5 // pred_check
        %p129 = pneg %p128
      $region14: #{tpu_custom_call.1} parent=5 // pred_check_branch
        %131 = sbr.rel (%p129) target = $region16
      $region15: #{tpu_custom_call.1} parent=5 // pred_region
        // Predicated region
        $region17: #{tpu_custom_call.1} parent=15 // pred_check
          %p132 = pneg %p51
        $region18: #{tpu_custom_call.1} parent=15 // pred_check_branch
          %134 = sbr.rel (%p132) target = $region20
        $region19: #{tpu_custom_call.1} parent=15 // pred_region
          %s135 = sand.u32 %s41, 1
          %s136 = scalar_lea.sflag [#allocation3], %s135
          %s137 = sand.u32 %s41, 1
          %s138 = smul.addr %s137, 6
          %s139 = scalar_lea.vmem [#allocation2], %s138
          %s141 = ssub.s32 96, 96
          %142 = vsyncadd %s136, %s141
          %s143 = smul.addr %s24, 3
          %s144 = sadd.s32 %s25, %s143
          %s145 = smul.addr %s144, 32
          %s146 = scalar_lea.hbm %s0, %s145
          %s147 = sshll.u32 %s139, 4
          %s148 = int_to_ptr.vmem [resolvable:$true] %s147
          %153 = dma.hbm_to_vmem [thread:$0]  %s146, 96, %s148, %s136, 32, 32, 2
        $region20: #{tpu_custom_call.1} parent=15 // pred_fallthru
          _
        // Predicated region
        $region21: #{tpu_custom_call.1} parent=15 // pred_check
          %p154 = pneg %p79
        $region22: #{tpu_custom_call.1} parent=15 // pred_check_branch
          %156 = sbr.rel (%p154) target = $region24
        $region23: #{tpu_custom_call.1} parent=15 // pred_region
          %s157 = sand.u32 %s69, 1
          %s158 = scalar_lea.sflag [#allocation6], %s157
          %s159 = sand.u32 %s69, 1
          %s160 = smul.addr %s159, 2
          %s161 = scalar_lea.vmem [#allocation5], %s160
          %s163 = ssub.s32 32, 32
          %164 = vsyncadd %s158, %s163
          %s165 = sadd.s32 %s25, %s24
          %s166 = smul.addr %s165, 32
          %s167 = scalar_lea.hbm %s1, %s166
          %s169 = sshll.u32 %s161, 4
          %s170 = int_to_ptr.vmem [resolvable:$true] %s169
          %172 = dma.hbm_to_vmem [thread:$0]  %s167, 32, %s170, %s158
        $region24: #{tpu_custom_call.1} parent=15 // pred_fallthru
          _
      $region16: #{tpu_custom_call.1} parent=5 // pred_fallthru
        _
      %p173 = scmp.le.s32.totalorder 1, %s17
      %p174 = scmp.lt.s32.totalorder %s17, 3
      %p175 = pnand %p173, %p174
      %p176 = pneg %p175
      // Predicated region
      $region25: #{tpu_custom_call.1} parent=5 // pred_check
        _
      $region26: #{tpu_custom_call.1} parent=5 // pred_check_branch
        %178 = sbr.rel (%p175) target = $region28
      $region27: #{tpu_custom_call.1} parent=5 // pred_region
        %s179 = ssub.s32 %s17, 1
        %s180 = sand.u32 %s44, 1
        %s181 = scalar_lea.sflag [#allocation3], %s180
        %s182 = sand.u32 %s44, 1
        %s183 = smul.addr %s182, 6
        %s184 = scalar_lea.vmem [#allocation2], %s183
        // Predicated region
        $region29: #{tpu_custom_call.1} parent=27 // pred_check
          %p185 = pneg %p57
        $region30: #{tpu_custom_call.1} parent=27 // pred_check_branch
          %187 = sbr.rel (%p185) target = $region32
        $region31: #{tpu_custom_call.1} parent=27 // pred_region
          %188 = dma.done %s181, 96
        $region32: #{tpu_custom_call.1} parent=27 // pred_fallthru
          _
        %s189 = sand.u32 %s72, 1
        %s190 = scalar_lea.sflag [#allocation6], %s189
        %s191 = sand.u32 %s72, 1
        %s192 = smul.addr %s191, 2
        %s193 = scalar_lea.vmem [#allocation5], %s192
        // Predicated region
        $region33: #{tpu_custom_call.1} parent=27 // pred_check
          %p194 = pneg %p85
        $region34: #{tpu_custom_call.1} parent=27 // pred_check_branch
          %196 = sbr.rel (%p194) target = $region36
        $region35: #{tpu_custom_call.1} parent=27 // pred_region
          %197 = dma.done %s190, 32
        $region36: #{tpu_custom_call.1} parent=27 // pred_fallthru
          _
        %s198 = sand.u32 %s44, 1
        %s199 = scalar_lea.sflag [#allocation3], %s198
        %s200 = sand.u32 %s44, 1
        %s201 = smul.addr %s200, 6
        %s202 = scalar_lea.vmem [#allocation2], %s201
        %p203 = pneg %p57
        %p204 = pneg %p54
        %s205 = sand.u32 %s72, 1
        %s206 = scalar_lea.sflag [#allocation6], %s205
        %s207 = sand.u32 %s72, 1
        %s208 = smul.addr %s207, 2
        %s209 = scalar_lea.vmem [#allocation5], %s208
        %p210 = pneg %p85
        %p211 = pneg %p82
        %p212 = pneg %p113
        %p213 = pneg %p110
        %s214 = sand.u32 %s100, 1
        %s215 = scalar_lea.sflag [#allocation4], %s214
        %s216 = sand.u32 %s100, 1
        %s217 = smul.addr %s216, 2
        %s218 = scalar_lea.vmem [#allocation7], %s217
        %v219 = vld [vmem:[%s193] sm:$0x3]
        %s220 = scalar_lea.vmem %s184, 4 [#allocation2]
        %v221 = vld [vmem:[%s220] sm:$0x3]
        %vm222 = vcmp.eq.s32.totalorder %v219, 1
        %s223 = scalar_lea.vmem %s184, 2 [#allocation2]
        %v224 = vld [vmem:[%s223] sm:$0x3]
        %v225 = vsel %vm222, %v224, %v221
        %vm226 = vcmp.eq.s32.totalorder %v219, 0
        %v227 = vld [vmem:[%s184] sm:$0x3]
        %v228 = vsel %vm226, %v227, %v225
        %229 = vst [vmem:[%s218] sm:$0x3] %v228
        %s230 = sand.u32 %s100, 1
        %s231 = scalar_lea.sflag [#allocation4], %s230
        %s232 = sand.u32 %s100, 1
        %s233 = smul.addr %s232, 2
        %s234 = scalar_lea.vmem [#allocation7], %s233
        // Predicated region
        $region37: #{tpu_custom_call.1} parent=27 // pred_check
          %p235 = pneg %p110
        $region38: #{tpu_custom_call.1} parent=27 // pred_check_branch
          %237 = sbr.rel (%p235) target = $region40
        $region39: #{tpu_custom_call.1} parent=27 // pred_region
          %s239 = ssub.s32 32, 32
          %240 = vsyncadd %s231, %s239
          %s241 = sadd.s32 %s27, %s26
          %s242 = smul.addr %s241, 32
          %s243 = scalar_lea.hbm %s2, %s242
          %s245 = sshll.u32 %s234, 4
          %s246 = int_to_ptr.vmem [resolvable:$true] %s245
          %248 = dma.vmem_to_hbm [thread:$0]  %s246, 32, %s243, %s231
        $region40: #{tpu_custom_call.1} parent=27 // pred_fallthru
          _
      $region28: #{tpu_custom_call.1} parent=5 // pred_fallthru
        _
      %p249 = scmp.le.s32.totalorder 2, %s17
      // Predicated region
      $region41: #{tpu_custom_call.1} parent=5 // pred_check
        %p250 = pneg %p249
      $region42: #{tpu_custom_call.1} parent=5 // pred_check_branch
        %252 = sbr.rel (%p250) target = $region44
      $region43: #{tpu_custom_call.1} parent=5 // pred_region
        %s253 = ssub.s32 %s17, 2
        // Predicated region
        $region45: #{tpu_custom_call.1} parent=43 // pred_check
          %p254 = pneg %p116
        $region46: #{tpu_custom_call.1} parent=43 // pred_check_branch
          %256 = sbr.rel (%p254) target = $region48
        $region47: #{tpu_custom_call.1} parent=43 // pred_region
          %s257 = sand.u32 %s101, 1
          %s258 = scalar_lea.sflag [#allocation4], %s257
          %s259 = sand.u32 %s101, 1
          %s260 = smul.addr %s259, 2
          %s261 = scalar_lea.vmem [#allocation7], %s260
          %262 = dma.done %s258, 32
        $region48: #{tpu_custom_call.1} parent=43 // pred_fallthru
          _
      $region44: #{tpu_custom_call.1} parent=5 // pred_fallthru
        _
    $region6: #{tpu_custom_call.1} parent=1 // loop_footer
      %s21 = sadd.s32 1, %s17
    $region7: #{tpu_custom_call.1} parent=1 // loop_footer_branch
      %16 = sbr.rel target = $region3
    $region8: #{tpu_custom_call.1} parent=1 // loop_exit
      _
    %263 = vsyncpa [#allocation3], 1
    %s264 = scalar_lea.sflag [#allocation3], 1
    %265 = vsyncpa %s264, 1
    %266 = vsyncpa [#allocation6], 1
    %s267 = scalar_lea.sflag [#allocation6], 1
    %268 = vsyncpa %s267, 1
    %269 = vsyncpa [#allocation4], 1
    %s270 = scalar_lea.sflag [#allocation4], 1
    %271 = vsyncpa %s270, 1

</llo_original>
